<compile_context>
chip_gen: v5e
topology: v5e:2x2
jax: 0.10.0
libtpu: 0.0.40
codegen_flags: <defaults>
</compile_context>

<pallas_src>
import functools

import jax
import jax.numpy as jnp
from jax.experimental import pallas as pl
from jax.experimental.pallas import tpu as pltpu


HIDDEN = 64
N_LAYERS = 2      # params_network is None -> 2 plain Linear+ReLU hidden layers
LANE = 128
SUBLANE = 8
MAX_BATCH_TILE = 8192


def _round_up(a, m):
    return ((a + m - 1) // m) * m


def _num_tensorcores():
    """Best-effort TensorCores-per-chip (2 on v7x, 1 on v5e/v6e)."""
    try:
        dev = jax.devices()[0]
    except Exception:
        return 1
    for attr in ("num_cores", "core_count"):
        v = getattr(dev, attr, None)
        if isinstance(v, int) and v > 0:
            return v
    kind = str(getattr(dev, "device_kind", "")).lower()
    return 2 if "v7" in kind else 1


def _vmem_capacity_bytes():
    """Best-effort per-core VMEM capacity; conservative 64 MiB (v7x) fallback."""
    try:
        cap = getattr(pltpu.get_tpu_info(), "vmem_capacity_bytes", None)
        if cap:
            return int(cap)
    except Exception:
        pass
    return 64 << 20


def mlp_kernel(x_ref,
               w0_ref, b0_ref,
               w1_ref, b1_ref,
               w2_ref, b2_ref,
               w3_ref, b3_ref,
               o_ref):
    """Fused 4-layer MLP on one batch tile. bf16 MXU operands, f32 accumulate;
    bias add + ReLU stay in f32; result stored in o_ref's dtype (bf16)."""

    def dense(h, w_ref, b_ref):
        return jnp.dot(h.astype(jnp.bfloat16), w_ref[...],
                       preferred_element_type=jnp.float32) + b_ref[...]

    h = x_ref[...]
    h = jnp.maximum(dense(h, w0_ref, b0_ref), 0.0)
    h = jnp.maximum(dense(h, w1_ref, b1_ref), 0.0)
    h = jnp.maximum(dense(h, w2_ref, b2_ref), 0.0)
    o_ref[...] = dense(h, w3_ref, b3_ref).astype(o_ref.dtype)


def _pack_params(params, in_dim):
    """Zero-pad feature dims to multiples of 128 lanes. Weights -> bf16 (MXU
    operands), biases stay f32 with shape (1, padded_out). Zero-padded rows /
    cols contribute exactly zero, so results are unchanged."""
    packed = []
    prev = in_dim
    for (w, b) in params:
        fi, fo = w.shape
        fo_p = _round_up(fo, LANE)
        w_p = jnp.zeros((prev, fo_p), jnp.float32)
        w_p = w_p.at[:fi, :fo].set(w.astype(jnp.float32))
        b_p = jnp.zeros((1, fo_p), jnp.float32)
        b_p = b_p.at[:, :fo].set(b.reshape(1, -1).astype(jnp.float32))
        packed.append((w_p.astype(jnp.bfloat16), b_p))
        prev = fo_p
    return packed


@functools.partial(jax.jit, static_argnames=("batch_tile",))
def mlp_forward(x, params, *, batch_tile=None):
    """x: (B, in_dim) float32 (bf16 also accepted).
    params: list of (W_t, b) with W_t of shape (in_features, out_features)."""
    B, in_dim = x.shape
    out_dim = params[-1][0].shape[1]

    packed = _pack_params(params, in_dim)
    out_pad = packed[-1][0].shape[1]

    num_cores = _num_tensorcores()
    vmem_cap = _vmem_capacity_bytes()
    x_isize = jnp.dtype(x.dtype).itemsize

    if batch_tile is None:
        # Big tiles amortize the ~0.35us per-grid-step overhead; split the
        # batch into >=2 steps only when >=2 TensorCores can run them (v7x).
        batch_tile = min(
            MAX_BATCH_TILE,
            max(SUBLANE, _round_up(pl.cdiv(B, max(1, num_cores)), SUBLANE)))

        # Shrink the tile until double-buffered x/out blocks + f32 intermediates
        # fit comfortably (< ~40% of physical VMEM per core).
        def footprint(t):
            return t * (2 * in_dim * x_isize + 2 * out_pad * 2 + 4 * LANE * 4)
        while batch_tile > SUBLANE and footprint(batch_tile) > 0.4 * vmem_cap:
            batch_tile = max(SUBLANE, _round_up(batch_tile // 2, SUBLANE))
    assert batch_tile % SUBLANE == 0, "batch_tile must be a multiple of 8"

    # Ragged last block (when batch_tile doesn't divide B) is clipped by Pallas;
    # no wrapper-side jnp.pad of x needed.
    grid = (pl.cdiv(B, batch_tile),)

    x_spec = pl.BlockSpec((batch_tile, in_dim), lambda i: (i, 0))
    out_spec = pl.BlockSpec((batch_tile, out_pad), lambda i: (i, 0))

    def whole(shape):
        # Constant block index -> weights/biases are DMA'd once, not per step.
        return pl.BlockSpec(shape, lambda i: (0,) * len(shape))

    in_specs = [x_spec]
    flat_params = []
    for (w, b) in packed:
        in_specs.append(whole(w.shape))
        in_specs.append(whole(b.shape))
        flat_params.append(w)
        flat_params.append(b)

    # VMEM budget: weights/biases (counted double-buffered to be safe — tiny),
    # double-buffered x/out blocks, f32 intermediates, plus fixed headroom.
    weight_bytes = sum(w.size * 2 + b.size * 4 for (w, b) in packed)
    io_bytes = 2 * batch_tile * in_dim * x_isize + 2 * batch_tile * out_pad * 2
    inter_bytes = 4 * batch_tile * LANE * 4
    need = 2 * weight_bytes + io_bytes + inter_bytes
    vmem_limit = int(min(max(int(need * 1.25) + (2 << 20), 8 << 20),
                         int(vmem_cap * 0.9)))

    flops = 2 * B * (in_dim * LANE + N_LAYERS * LANE * LANE + LANE * out_pad)
    bytes_accessed = (B * in_dim * x_isize + B * out_pad * 2 + weight_bytes)
    cost = pl.CostEstimate(flops=flops, transcendentals=0,
                           bytes_accessed=bytes_accessed)

    y = pl.pallas_call(
        mlp_kernel,
        out_shape=jax.ShapeDtypeStruct((B, out_pad), jnp.bfloat16),
        grid_spec=pltpu.PrefetchScalarGridSpec(
            num_scalar_prefetch=0,
            grid=grid,
            in_specs=in_specs,
            out_specs=out_spec,
        ),
        compiler_params=pltpu.CompilerParams(
            dimension_semantics=("parallel",),
            vmem_limit_bytes=vmem_limit,
        ),
        cost_estimate=cost,
    )(x, *flat_params)

    # Drop padded feature columns; restore the module's f32 output dtype.
    return y[:, :out_dim].astype(jnp.float32)


def init_linear(key, fan_in, fan_out):
    """Kaiming-uniform-style init matching nn.Linear. Returns W transposed to
    (fan_in, fan_out) and bias of shape (1, fan_out)."""
    kw, kb = jax.random.split(key)
    bound = 1.0 / jnp.sqrt(fan_in)
    w = jax.random.uniform(kw, (fan_in, fan_out), jnp.float32, -bound, bound)
    b = jax.random.uniform(kb, (1, fan_out), jnp.float32, -bound, bound)
    return w, b


def make_params(key, input_dim, output_dim):
    dims = [input_dim] + [HIDDEN] * (N_LAYERS + 1) + [output_dim]
    params = []
    for i in range(len(dims) - 1):
        key, sub = jax.random.split(key)
        params.append(init_linear(sub, dims[i], dims[i + 1]))
    return params


def mlp_reference(x, params):
    """Pure-JAX reference mirroring the kernel's bf16-operand / f32-accumulate
    math and the bf16 output store."""
    h = x
    n = len(params)
    for i, (w, b) in enumerate(params):
        h = jnp.dot(h.astype(jnp.bfloat16), w.astype(jnp.bfloat16),
                    preferred_element_type=jnp.float32) + b.reshape(1, -1)
        if i < n - 1:
            h = jnp.maximum(h, 0.0)
    return h.astype(jnp.bfloat16).astype(jnp.float32)


if __name__ == "__main__":
    key = jax.random.PRNGKey(0)
    k_x, k_p = jax.random.split(key)

    batch, input_dim, output_dim = 128, 32, 16
    x = jax.random.normal(k_x, (batch, input_dim), jnp.float32)
    params = make_params(k_p, input_dim, output_dim)

    y = jax.block_until_ready(mlp_forward(x, params))
    y_ref = mlp_reference(x, params)
    assert y.shape == (batch, output_dim)
    assert jnp.allclose(y, y_ref, atol=2e-2, rtol=2e-2), "mismatch vs reference"

    # Non-divisible batch exercises the ragged-last-block path (no jnp.pad).
    x2 = jax.random.normal(k_x, (100, input_dim), jnp.float32)
    y2 = jax.block_until_ready(mlp_forward(x2, params))
    y2_ref = mlp_reference(x2, params)
    assert y2.shape == (100, output_dim)
    assert jnp.allclose(y2, y2_ref, atol=2e-2, rtol=2e-2), "mismatch (ragged batch)"

    print("KERNEL_OK")
</pallas_src>

<mosaic_0001>
module attributes {stable_mosaic.version = 11 : i64} {
  func.func @mlp_kernel(%arg0: i32, %arg1: memref<128x32xf32, #tpu.memory_space<vmem>>, %arg2: memref<32x128xbf16, #tpu.memory_space<vmem>>, %arg3: memref<1x128xf32, #tpu.memory_space<vmem>>, %arg4: memref<128x128xbf16, #tpu.memory_space<vmem>>, %arg5: memref<1x128xf32, #tpu.memory_space<vmem>>, %arg6: memref<128x128xbf16, #tpu.memory_space<vmem>>, %arg7: memref<1x128xf32, #tpu.memory_space<vmem>>, %arg8: memref<128x128xbf16, #tpu.memory_space<vmem>>, %arg9: memref<1x128xf32, #tpu.memory_space<vmem>>, %arg10: memref<128x128xbf16, #tpu.memory_space<vmem>>) attributes {dimension_semantics = [#tpu.dimension_semantics<parallel>], iteration_bounds = array<i64: 1>, scalar_prefetch = 0 : i64, scratch_operands = 0 : i64, tpu.core_type = #tpu.core_type<tc>, window_params = [{transform_indices = @transform_0, window_bounds = array<i64: 128, 32>}, {pipeline_mode = #tpu.pipeline_mode<synchronous>, transform_indices = @transform_1, window_bounds = array<i64: 32, 128>}, {pipeline_mode = #tpu.pipeline_mode<synchronous>, transform_indices = @transform_2, window_bounds = array<i64: 1, 128>}, {pipeline_mode = #tpu.pipeline_mode<synchronous>, transform_indices = @transform_3, window_bounds = array<i64: 128, 128>}, {pipeline_mode = #tpu.pipeline_mode<synchronous>, transform_indices = @transform_4, window_bounds = array<i64: 1, 128>}, {pipeline_mode = #tpu.pipeline_mode<synchronous>, transform_indices = @transform_5, window_bounds = array<i64: 128, 128>}, {pipeline_mode = #tpu.pipeline_mode<synchronous>, transform_indices = @transform_6, window_bounds = array<i64: 1, 128>}, {pipeline_mode = #tpu.pipeline_mode<synchronous>, transform_indices = @transform_7, window_bounds = array<i64: 128, 128>}, {pipeline_mode = #tpu.pipeline_mode<synchronous>, transform_indices = @transform_8, window_bounds = array<i64: 1, 128>}, {transform_indices = @transform_9, window_bounds = array<i64: 128, 128>}]} {
    %c0 = arith.constant 0 : index
    %c0_0 = arith.constant 0 : index
    %0 = vector.load %arg1[%c0, %c0_0] : memref<128x32xf32, #tpu.memory_space<vmem>>, vector<128x32xf32>
    %1 = arith.truncf %0 : vector<128x32xf32> to vector<128x32xbf16>
    %c0_1 = arith.constant 0 : index
    %c0_2 = arith.constant 0 : index
    %2 = vector.load %arg2[%c0_1, %c0_2] : memref<32x128xbf16, #tpu.memory_space<vmem>>, vector<32x128xbf16>
    %cst = arith.constant dense<0.000000e+00> : vector<128x128xf32>
    %3 = tpu.matmul %1, %2, %cst {dimension_numbers = #tpu.dot_dimension_numbers<[1], [0], [0], [1], [0, 0, 1, 1], [], []>} : vector<128x32xbf16>, vector<32x128xbf16>, vector<128x128xf32> -> vector<128x128xf32>
    %c0_3 = arith.constant 0 : index
    %c0_4 = arith.constant 0 : index
    %4 = vector.load %arg3[%c0_3, %c0_4] : memref<1x128xf32, #tpu.memory_space<vmem>>, vector<1x128xf32>
    %5 = vector.broadcast %4 : vector<1x128xf32> to vector<128x128xf32>
    %6 = arith.addf %3, %5 : vector<128x128xf32>
    %cst_5 = arith.constant 0.000000e+00 : f32
    %7 = vector.broadcast %cst_5 : f32 to vector<128x128xf32>
    %8 = arith.maximumf %6, %7 : vector<128x128xf32>
    %9 = arith.truncf %8 : vector<128x128xf32> to vector<128x128xbf16>
    %c0_6 = arith.constant 0 : index
    %c0_7 = arith.constant 0 : index
    %10 = vector.load %arg4[%c0_6, %c0_7] : memref<128x128xbf16, #tpu.memory_space<vmem>>, vector<128x128xbf16>
    %cst_8 = arith.constant dense<0.000000e+00> : vector<128x128xf32>
    %11 = tpu.matmul %9, %10, %cst_8 {dimension_numbers = #tpu.dot_dimension_numbers<[1], [0], [0], [1], [0, 0, 1, 1], [], []>} : vector<128x128xbf16>, vector<128x128xbf16>, vector<128x128xf32> -> vector<128x128xf32>
    %c0_9 = arith.constant 0 : index
    %c0_10 = arith.constant 0 : index
    %12 = vector.load %arg5[%c0_9, %c0_10] : memref<1x128xf32, #tpu.memory_space<vmem>>, vector<1x128xf32>
    %13 = vector.broadcast %12 : vector<1x128xf32> to vector<128x128xf32>
    %14 = arith.addf %11, %13 : vector<128x128xf32>
    %cst_11 = arith.constant 0.000000e+00 : f32
    %15 = vector.broadcast %cst_11 : f32 to vector<128x128xf32>
    %16 = arith.maximumf %14, %15 : vector<128x128xf32>
    %17 = arith.truncf %16 : vector<128x128xf32> to vector<128x128xbf16>
    %c0_12 = arith.constant 0 : index
    %c0_13 = arith.constant 0 : index
    %18 = vector.load %arg6[%c0_12, %c0_13] : memref<128x128xbf16, #tpu.memory_space<vmem>>, vector<128x128xbf16>
    %cst_14 = arith.constant dense<0.000000e+00> : vector<128x128xf32>
    %19 = tpu.matmul %17, %18, %cst_14 {dimension_numbers = #tpu.dot_dimension_numbers<[1], [0], [0], [1], [0, 0, 1, 1], [], []>} : vector<128x128xbf16>, vector<128x128xbf16>, vector<128x128xf32> -> vector<128x128xf32>
    %c0_15 = arith.constant 0 : index
    %c0_16 = arith.constant 0 : index
    %20 = vector.load %arg7[%c0_15, %c0_16] : memref<1x128xf32, #tpu.memory_space<vmem>>, vector<1x128xf32>
    %21 = vector.broadcast %20 : vector<1x128xf32> to vector<128x128xf32>
    %22 = arith.addf %19, %21 : vector<128x128xf32>
    %cst_17 = arith.constant 0.000000e+00 : f32
    %23 = vector.broadcast %cst_17 : f32 to vector<128x128xf32>
    %24 = arith.maximumf %22, %23 : vector<128x128xf32>
    %25 = arith.truncf %24 : vector<128x128xf32> to vector<128x128xbf16>
    %c0_18 = arith.constant 0 : index
    %c0_19 = arith.constant 0 : index
    %26 = vector.load %arg8[%c0_18, %c0_19] : memref<128x128xbf16, #tpu.memory_space<vmem>>, vector<128x128xbf16>
    %cst_20 = arith.constant dense<0.000000e+00> : vector<128x128xf32>
    %27 = tpu.matmul %25, %26, %cst_20 {dimension_numbers = #tpu.dot_dimension_numbers<[1], [0], [0], [1], [0, 0, 1, 1], [], []>} : vector<128x128xbf16>, vector<128x128xbf16>, vector<128x128xf32> -> vector<128x128xf32>
    %c0_21 = arith.constant 0 : index
    %c0_22 = arith.constant 0 : index
    %28 = vector.load %arg9[%c0_21, %c0_22] : memref<1x128xf32, #tpu.memory_space<vmem>>, vector<1x128xf32>
    %29 = vector.broadcast %28 : vector<1x128xf32> to vector<128x128xf32>
    %30 = arith.addf %27, %29 : vector<128x128xf32>
    %31 = arith.truncf %30 : vector<128x128xf32> to vector<128x128xbf16>
    %c0_23 = arith.constant 0 : index
    %c0_24 = arith.constant 0 : index
    %32 = vector.load %arg10[%c0_23, %c0_24] : memref<128x128xbf16, #tpu.memory_space<vmem>>, vector<128x128xbf16>
    tpu.vector_store %arg10[%c0_23, %c0_24], %31 {strides = array<i32>} : memref<128x128xbf16, #tpu.memory_space<vmem>>, vector<128x128xbf16>,
    return
  }
  func.func @transform_0(%arg0: i32) -> (i32, i32) {
    %c0_i32 = arith.constant 0 : i32
    %c0_i32_0 = arith.constant 0 : i32
    return %arg0, %c0_i32 : i32, i32
  }
  func.func @transform_1(%arg0: i32) -> (i32, i32) {
    %c0_i32 = arith.constant 0 : i32
    %c0_i32_0 = arith.constant 0 : i32
    %c0_i32_1 = arith.constant 0 : i32
    return %c0_i32, %c0_i32_0 : i32, i32
  }
  func.func @transform_2(%arg0: i32) -> (i32, i32) {
    %c0_i32 = arith.constant 0 : i32
    %c0_i32_0 = arith.constant 0 : i32
    %c0_i32_1 = arith.constant 0 : i32
    return %c0_i32, %c0_i32_0 : i32, i32
  }
  func.func @transform_3(%arg0: i32) -> (i32, i32) {
    %c0_i32 = arith.constant 0 : i32
    %c0_i32_0 = arith.constant 0 : i32
    %c0_i32_1 = arith.constant 0 : i32
    return %c0_i32, %c0_i32_0 : i32, i32
  }
  func.func @transform_4(%arg0: i32) -> (i32, i32) {
    %c0_i32 = arith.constant 0 : i32
    %c0_i32_0 = arith.constant 0 : i32
    %c0_i32_1 = arith.constant 0 : i32
    return %c0_i32, %c0_i32_0 : i32, i32
  }
  func.func @transform_5(%arg0: i32) -> (i32, i32) {
    %c0_i32 = arith.constant 0 : i32
    %c0_i32_0 = arith.constant 0 : i32
    %c0_i32_1 = arith.constant 0 : i32
    return %c0_i32, %c0_i32_0 : i32, i32
  }
  func.func @transform_6(%arg0: i32) -> (i32, i32) {
    %c0_i32 = arith.constant 0 : i32
    %c0_i32_0 = arith.constant 0 : i32
    %c0_i32_1 = arith.constant 0 : i32
    return %c0_i32, %c0_i32_0 : i32, i32
  }
  func.func @transform_7(%arg0: i32) -> (i32, i32) {
    %c0_i32 = arith.constant 0 : i32
    %c0_i32_0 = arith.constant 0 : i32
    %c0_i32_1 = arith.constant 0 : i32
    return %c0_i32, %c0_i32_0 : i32, i32
  }
  func.func @transform_8(%arg0: i32) -> (i32, i32) {
    %c0_i32 = arith.constant 0 : i32
    %c0_i32_0 = arith.constant 0 : i32
    %c0_i32_1 = arith.constant 0 : i32
    return %c0_i32, %c0_i32_0 : i32, i32
  }
  func.func @transform_9(%arg0: i32) -> (i32, i32) {
    %c0_i32 = arith.constant 0 : i32
    %c0_i32_0 = arith.constant 0 : i32
    return %arg0, %c0_i32 : i32, i32
  }
}

</mosaic_0001>

<llo_original>
// kernel: mlp_forward.1
$region0: #{mlp_forward.1}
  #allocation0 [shape = 'u32[]', space=smem, size = 0x4, offset = 0x4, fixed_abs, tag = 'smem constant byte address 0x4 - core index']
  #allocation1 [shape = 'u32[72,128]{1,0:T(1,128)}', space=vmem, size = 0x9000, scoped, tag = 'internal scratch']
  %s0 = inlined_call_operand.vmem [shape: f32[128,32], index: 0, kind: input, shape index: {}]
  %s1 = inlined_call_operand.vmem [shape: bf16[32,128], index: 1, kind: input, shape index: {}]
  %s2 = inlined_call_operand.vmem [shape: f32[1,128], index: 2, kind: input, shape index: {}]
  %s3 = inlined_call_operand.vmem [shape: bf16[128,128], index: 3, kind: input, shape index: {}]
  %s4 = inlined_call_operand.vmem [shape: f32[1,128], index: 4, kind: input, shape index: {}]
  %s5 = inlined_call_operand.vmem [shape: bf16[128,128], index: 5, kind: input, shape index: {}]
  %s6 = inlined_call_operand.vmem [shape: f32[1,128], index: 6, kind: input, shape index: {}]
  %s7 = inlined_call_operand.vmem [shape: bf16[128,128], index: 7, kind: input, shape index: {}]
  %s8 = inlined_call_operand.vmem [shape: f32[1,128], index: 8, kind: input, shape index: {}]
  %s9 = inlined_call_operand.vmem [shape: bf16[128,128], index: 9, kind: output, shape index: {}]
  %s10 = sld [smem:[#allocation0]]
  $region46: #{mlp_forward.1} parent=0
    _
  %s12 = ssub.s32 1, %s10
  %s13 = scalar_select 0, %s12, %s10
  // Predicated region
  $region2: #{mlp_forward.1} parent=0 // pred_check
    _
  $region3: #{mlp_forward.1} parent=0 // pred_check_branch
    %15 = sbr.rel (0) target = $region5
  $region4: #{mlp_forward.1} parent=0 // pred_region
    _
  $region5: #{mlp_forward.1} parent=0 // pred_fallthru
    _
  // Predicated region
  $region6: #{mlp_forward.1} parent=0 // pred_check
    _
  $region7: #{mlp_forward.1} parent=0 // pred_check_branch
    %17 = sbr.rel (0) target = $region9
  $region8: #{mlp_forward.1} parent=0 // pred_region
    _
  $region9: #{mlp_forward.1} parent=0 // pred_fallthru
    _
  // Predicated region
  $region10: #{mlp_forward.1} parent=0 // pred_check
    _
  $region11: #{mlp_forward.1} parent=0 // pred_check_branch
    %19 = sbr.rel (0) target = $region13
  $region12: #{mlp_forward.1} parent=0 // pred_region
    _
  $region13: #{mlp_forward.1} parent=0 // pred_fallthru
    _
  // Predicated region
  $region14: #{mlp_forward.1} parent=0 // pred_check
    _
  $region15: #{mlp_forward.1} parent=0 // pred_check_branch
    %21 = sbr.rel (0) target = $region17
  $region16: #{mlp_forward.1} parent=0 // pred_region
    _
  $region17: #{mlp_forward.1} parent=0 // pred_fallthru
    _
  // Predicated region
  $region18: #{mlp_forward.1} parent=0 // pred_check
    _
  $region19: #{mlp_forward.1} parent=0 // pred_check_branch
    %23 = sbr.rel (0) target = $region21
  $region20: #{mlp_forward.1} parent=0 // pred_region
    _
  $region21: #{mlp_forward.1} parent=0 // pred_fallthru
    _
  // Predicated region
  $region22: #{mlp_forward.1} parent=0 // pred_check
    _
  $region23: #{mlp_forward.1} parent=0 // pred_check_branch
    %25 = sbr.rel (0) target = $region25
  $region24: #{mlp_forward.1} parent=0 // pred_region
    _
  $region25: #{mlp_forward.1} parent=0 // pred_fallthru
    _
  // Predicated region
  $region26: #{mlp_forward.1} parent=0 // pred_check
    _
  $region27: #{mlp_forward.1} parent=0 // pred_check_branch
    %27 = sbr.rel (0) target = $region29
  $region28: #{mlp_forward.1} parent=0 // pred_region
    _
  $region29: #{mlp_forward.1} parent=0 // pred_fallthru
    _
  // Predicated region
  $region30: #{mlp_forward.1} parent=0 // pred_check
    _
  $region31: #{mlp_forward.1} parent=0 // pred_check_branch
    %29 = sbr.rel (0) target = $region33
  $region32: #{mlp_forward.1} parent=0 // pred_region
    _
  $region33: #{mlp_forward.1} parent=0 // pred_fallthru
    _
  // Predicated region
  $region34: #{mlp_forward.1} parent=0 // pred_check
    _
  $region35: #{mlp_forward.1} parent=0 // pred_check_branch
    %31 = sbr.rel (0) target = $region37
  $region36: #{mlp_forward.1} parent=0 // pred_region
    _
  $region37: #{mlp_forward.1} parent=0 // pred_fallthru
    _
  %v33 = vld [vmem:[%s0] sm:$0xff]
  %v34 = vld [vmem:[%s0 + $0x8] sm:$0xff]
  %v35 = vld [vmem:[%s0 + $0x10] sm:$0xff]
  %v36 = vld [vmem:[%s0 + $0x18] sm:$0xff]
  %v37 = vld [vmem:[%s0 + $0x20] sm:$0xff]
  %v38 = vld [vmem:[%s0 + $0x28] sm:$0xff]
  %v39 = vld [vmem:[%s0 + $0x30] sm:$0xff]
  %v40 = vld [vmem:[%s0 + $0x38] sm:$0xff]
  %v41 = vld [vmem:[%s0 + $0x40] sm:$0xff]
  %v42 = vld [vmem:[%s0 + $0x48] sm:$0xff]
  %v43 = vld [vmem:[%s0 + $0x50] sm:$0xff]
  %v44 = vld [vmem:[%s0 + $0x58] sm:$0xff]
  %v45 = vld [vmem:[%s0 + $0x60] sm:$0xff]
  %v46 = vld [vmem:[%s0 + $0x68] sm:$0xff]
  %v47 = vld [vmem:[%s0 + $0x70] sm:$0xff]
  %v48 = vld [vmem:[%s0 + $0x78] sm:$0xff]
  %v49 = vpack.c.bf16 %v34, %v33
  %v50 = vpack.c.bf16 %v36, %v35
  %v51 = vpack.c.bf16 %v38, %v37
  %v52 = vpack.c.bf16 %v40, %v39
  %v53 = vpack.c.bf16 %v42, %v41
  %v54 = vpack.c.bf16 %v44, %v43
  %v55 = vpack.c.bf16 %v46, %v45
  %v56 = vpack.c.bf16 %v48, %v47
  %v57 = vld [vmem:[%s1] sm:$0xf]
  %v58 = vld [vmem:[%s1 + $0x4] sm:$0xf]
  %v59 = vld [vmem:[%s1 + $0x8] sm:$0xf]
  %v60 = vld [vmem:[%s1 + $0xc] sm:$0xf]
  %v61 = vld [vmem:[%s2] sm:$0x1]
  %v63 = vperm.slane %v61, 0
  %v69 = vunpack.c.l.b16 %v57
  %v70 = vunpack.c.l.b16 %v58
  %v71 = vunpack.c.l.b16 %v59
  %v72 = vunpack.c.l.b16 %v60
  %v73 = vpack.c.b16 %v70, %v69
  %v74 = vpack.c.b16 %v72, %v71
  %vm77 = vcmask 261120
  %v79 = vsel %vm77, %v49, 0
  %v82 = vsel %vm77, %v50, 0
  %v85 = vsel %vm77, %v51, 0
  %v88 = vsel %vm77, %v52, 0
  %v91 = vsel %vm77, %v53, 0
  %v94 = vsel %vm77, %v54, 0
  %v97 = vsel %vm77, %v55, 0
  %v100 = vsel %vm77, %v56, 0
  %102 = vmatpush.bf16.msra.mxu0 0
  %103 = vmatpush.bf16.msra.mxu0 0
  %104 = vmatpush.bf16.msra.mxu0 0
  %105 = vmatpush.bf16.msra.mxu0 0
  %106 = vmatpush.bf16.msra.mxu0 0
  %107 = vmatpush.bf16.msra.mxu0 0
  %108 = vmatpush.bf16.msra.mxu0 %v74
  %109 = vmatpush.bf16.msra.mxu0 %v73
  %110 = vmatmul.bf16.gmra.mxu0 %v79
  %v111 = vpop.f32.mrf.mxu0
  %v112 = vadd.f32 %v63, %v111
  %v113 = vpop.f32.mrf.mxu0
  %v114 = vadd.f32 %v63, %v113
  %115 = vmatmul.bf16.gmra.mxu0 %v82
  %v116 = vpop.f32.mrf.mxu0
  %v117 = vadd.f32 %v63, %v116
  %v118 = vpop.f32.mrf.mxu0
  %v119 = vadd.f32 %v63, %v118
  %120 = vmatmul.bf16.gmra.mxu0 %v85
  %v121 = vpop.f32.mrf.mxu0
  %v122 = vadd.f32 %v63, %v121
  %v123 = vpop.f32.mrf.mxu0
  %v124 = vadd.f32 %v63, %v123
  %125 = vmatmul.bf16.gmra.mxu0 %v88
  %v126 = vpop.f32.mrf.mxu0
  %v127 = vadd.f32 %v63, %v126
  %v128 = vpop.f32.mrf.mxu0
  %v129 = vadd.f32 %v63, %v128
  %130 = vmatmul.bf16.gmra.mxu0 %v91
  %v131 = vpop.f32.mrf.mxu0
  %v132 = vadd.f32 %v63, %v131
  %v133 = vpop.f32.mrf.mxu0
  %v134 = vadd.f32 %v63, %v133
  %135 = vmatmul.bf16.gmra.mxu0 %v94
  %v136 = vpop.f32.mrf.mxu0
  %v137 = vadd.f32 %v63, %v136
  %v138 = vpop.f32.mrf.mxu0
  %v139 = vadd.f32 %v63, %v138
  %140 = vmatmul.bf16.gmra.mxu0 %v97
  %v141 = vpop.f32.mrf.mxu0
  %v142 = vadd.f32 %v63, %v141
  %v143 = vpop.f32.mrf.mxu0
  %v144 = vadd.f32 %v63, %v143
  %145 = vmatmul.bf16.gmra.mxu0 %v100
  %v146 = vpop.f32.mrf.mxu0
  %v147 = vadd.f32 %v63, %v146
  %v148 = vpop.f32.mrf.mxu0
  %v149 = vadd.f32 %v63, %v148
  %150 = vdwg.mxu0
  %v151 = vmax.f32 %v112, 0.0
  %v152 = vmax.f32 %v114, 0.0
  %v153 = vmax.f32 %v117, 0.0
  %v154 = vmax.f32 %v119, 0.0
  %v155 = vmax.f32 %v122, 0.0
  %v156 = vmax.f32 %v124, 0.0
  %v157 = vmax.f32 %v127, 0.0
  %v158 = vmax.f32 %v129, 0.0
  %v159 = vmax.f32 %v132, 0.0
  %v160 = vmax.f32 %v134, 0.0
  %v161 = vmax.f32 %v137, 0.0
  %v162 = vmax.f32 %v139, 0.0
  %v163 = vmax.f32 %v142, 0.0
  %v164 = vmax.f32 %v144, 0.0
  %v165 = vmax.f32 %v147, 0.0
  %v166 = vmax.f32 %v149, 0.0
  %v167 = vpack.c.bf16 %v152, %v151
  %v168 = vpack.c.bf16 %v154, %v153
  %v169 = vpack.c.bf16 %v156, %v155
  %v170 = vpack.c.bf16 %v158, %v157
  %v171 = vpack.c.bf16 %v160, %v159
  %v172 = vpack.c.bf16 %v162, %v161
  %v173 = vpack.c.bf16 %v164, %v163
  %v174 = vpack.c.bf16 %v166, %v165
  %v175 = vld [vmem:[%s3] sm:$0xf]
  %v176 = vld [vmem:[%s3 + $0x4] sm:$0xf]
  %v177 = vld [vmem:[%s3 + $0x8] sm:$0xf]
  %v178 = vld [vmem:[%s3 + $0xc] sm:$0xf]
  %v179 = vld [vmem:[%s3 + $0x10] sm:$0xf]
  %v180 = vld [vmem:[%s3 + $0x14] sm:$0xf]
  %v181 = vld [vmem:[%s3 + $0x18] sm:$0xf]
  %v182 = vld [vmem:[%s3 + $0x1c] sm:$0xf]
  %v183 = vld [vmem:[%s3 + $0x20] sm:$0xf]
  %v184 = vld [vmem:[%s3 + $0x24] sm:$0xf]
  %v185 = vld [vmem:[%s3 + $0x28] sm:$0xf]
  %v186 = vld [vmem:[%s3 + $0x2c] sm:$0xf]
  %v187 = vld [vmem:[%s3 + $0x30] sm:$0xf]
  %v188 = vld [vmem:[%s3 + $0x34] sm:$0xf]
  %v189 = vld [vmem:[%s3 + $0x38] sm:$0xf]
  %v190 = vld [vmem:[%s3 + $0x3c] sm:$0xf]
  %v191 = vld [vmem:[%s4] sm:$0x1]
  %v193 = vperm.slane %v191, 0
  %v211 = vunpack.c.l.b16 %v175
  %v212 = vunpack.c.l.b16 %v176
  %v213 = vunpack.c.l.b16 %v177
  %v214 = vunpack.c.l.b16 %v178
  %v215 = vunpack.c.l.b16 %v179
  %v216 = vunpack.c.l.b16 %v180
  %v217 = vunpack.c.l.b16 %v181
  %v218 = vunpack.c.l.b16 %v182
  %v219 = vunpack.c.l.b16 %v183
  %v220 = vunpack.c.l.b16 %v184
  %v221 = vunpack.c.l.b16 %v185
  %v222 = vunpack.c.l.b16 %v186
  %v223 = vunpack.c.l.b16 %v187
  %v224 = vunpack.c.l.b16 %v188
  %v225 = vunpack.c.l.b16 %v189
  %v226 = vunpack.c.l.b16 %v190
  %v227 = vpack.c.b16 %v212, %v211
  %v228 = vpack.c.b16 %v214, %v213
  %v229 = vpack.c.b16 %v216, %v215
  %v230 = vpack.c.b16 %v218, %v217
  %v231 = vpack.c.b16 %v220, %v219
  %v232 = vpack.c.b16 %v222, %v221
  %v233 = vpack.c.b16 %v224, %v223
  %v234 = vpack.c.b16 %v226, %v225
  %243 = vmatpush.bf16.msra.mxu0 %v234
  %244 = vmatpush.bf16.msra.mxu0 %v233
  %245 = vmatpush.bf16.msra.mxu0 %v232
  %246 = vmatpush.bf16.msra.mxu0 %v231
  %247 = vmatpush.bf16.msra.mxu0 %v230
  %248 = vmatpush.bf16.msra.mxu0 %v229
  %249 = vmatpush.bf16.msra.mxu0 %v228
  %250 = vmatpush.bf16.msra.mxu0 %v227
  %251 = vmatmul.bf16.gmra.mxu0 %v167
  %v252 = vpop.f32.mrf.mxu0
  %v253 = vadd.f32 %v193, %v252
  %v254 = vpop.f32.mrf.mxu0
  %v255 = vadd.f32 %v193, %v254
  %256 = vmatmul.bf16.gmra.mxu0 %v168
  %v257 = vpop.f32.mrf.mxu0
  %v258 = vadd.f32 %v193, %v257
  %v259 = vpop.f32.mrf.mxu0
  %v260 = vadd.f32 %v193, %v259
  %261 = vmatmul.bf16.gmra.mxu0 %v169
  %v262 = vpop.f32.mrf.mxu0
  %v263 = vadd.f32 %v193, %v262
  %v264 = vpop.f32.mrf.mxu0
  %v265 = vadd.f32 %v193, %v264
  %266 = vmatmul.bf16.gmra.mxu0 %v170
  %v267 = vpop.f32.mrf.mxu0
  %v268 = vadd.f32 %v193, %v267
  %v269 = vpop.f32.mrf.mxu0
  %v270 = vadd.f32 %v193, %v269
  %271 = vmatmul.bf16.gmra.mxu0 %v171
  %v272 = vpop.f32.mrf.mxu0
  %v273 = vadd.f32 %v193, %v272
  %v274 = vpop.f32.mrf.mxu0
  %v275 = vadd.f32 %v193, %v274
  %276 = vmatmul.bf16.gmra.mxu0 %v172
  %v277 = vpop.f32.mrf.mxu0
  %v278 = vadd.f32 %v193, %v277
  %v279 = vpop.f32.mrf.mxu0
  %v280 = vadd.f32 %v193, %v279
  %281 = vmatmul.bf16.gmra.mxu0 %v173
  %v282 = vpop.f32.mrf.mxu0
  %v283 = vadd.f32 %v193, %v282
  %v284 = vpop.f32.mrf.mxu0
  %v285 = vadd.f32 %v193, %v284
  %286 = vmatmul.bf16.gmra.mxu0 %v174
  %v287 = vpop.f32.mrf.mxu0
  %v288 = vadd.f32 %v193, %v287
  %v289 = vpop.f32.mrf.mxu0
  %v290 = vadd.f32 %v193, %v289
  %291 = vdwg.mxu0
  %v292 = vmax.f32 %v253, 0.0
  %v293 = vmax.f32 %v255, 0.0
  %v294 = vmax.f32 %v258, 0.0
  %v295 = vmax.f32 %v260, 0.0
  %v296 = vmax.f32 %v263, 0.0
  %v297 = vmax.f32 %v265, 0.0
  %v298 = vmax.f32 %v268, 0.0
  %v299 = vmax.f32 %v270, 0.0
  %v300 = vmax.f32 %v273, 0.0
  %v301 = vmax.f32 %v275, 0.0
  %v302 = vmax.f32 %v278, 0.0
  %v303 = vmax.f32 %v280, 0.0
  %v304 = vmax.f32 %v283, 0.0
  %v305 = vmax.f32 %v285, 0.0
  %v306 = vmax.f32 %v288, 0.0
  %v307 = vmax.f32 %v290, 0.0
  %v308 = vpack.c.bf16 %v293, %v292
  %v309 = vpack.c.bf16 %v295, %v294
  %v310 = vpack.c.bf16 %v297, %v296
  %v311 = vpack.c.bf16 %v299, %v298
  %v312 = vpack.c.bf16 %v301, %v300
  %v313 = vpack.c.bf16 %v303, %v302
  %v314 = vpack.c.bf16 %v305, %v304
  %v315 = vpack.c.bf16 %v307, %v306
  %v316 = vld [vmem:[%s5] sm:$0xf]
  %v317 = vld [vmem:[%s5 + $0x4] sm:$0xf]
  %v318 = vld [vmem:[%s5 + $0x8] sm:$0xf]
  %v319 = vld [vmem:[%s5 + $0xc] sm:$0xf]
  %v320 = vld [vmem:[%s5 + $0x10] sm:$0xf]
  %v321 = vld [vmem:[%s5 + $0x14] sm:$0xf]
  %v322 = vld [vmem:[%s5 + $0x18] sm:$0xf]
  %v323 = vld [vmem:[%s5 + $0x1c] sm:$0xf]
  %v324 = vld [vmem:[%s5 + $0x20] sm:$0xf]
  %v325 = vld [vmem:[%s5 + $0x24] sm:$0xf]
  %v326 = vld [vmem:[%s5 + $0x28] sm:$0xf]
  %v327 = vld [vmem:[%s5 + $0x2c] sm:$0xf]
  %v328 = vld [vmem:[%s5 + $0x30] sm:$0xf]
  %v329 = vld [vmem:[%s5 + $0x34] sm:$0xf]
  %v330 = vld [vmem:[%s5 + $0x38] sm:$0xf]
  %v331 = vld [vmem:[%s5 + $0x3c] sm:$0xf]
  %v332 = vld [vmem:[%s6] sm:$0x1]
  %v334 = vperm.slane %v332, 0
  %v352 = vunpack.c.l.b16 %v316
  %v353 = vunpack.c.l.b16 %v317
  %v354 = vunpack.c.l.b16 %v318
  %v355 = vunpack.c.l.b16 %v319
  %v356 = vunpack.c.l.b16 %v320
  %v357 = vunpack.c.l.b16 %v321
  %v358 = vunpack.c.l.b16 %v322
  %v359 = vunpack.c.l.b16 %v323
  %v360 = vunpack.c.l.b16 %v324
  %v361 = vunpack.c.l.b16 %v325
  %v362 = vunpack.c.l.b16 %v326
  %v363 = vunpack.c.l.b16 %v327
  %v364 = vunpack.c.l.b16 %v328
  %v365 = vunpack.c.l.b16 %v329
  %v366 = vunpack.c.l.b16 %v330
  %v367 = vunpack.c.l.b16 %v331
  %v368 = vpack.c.b16 %v353, %v352
  %v369 = vpack.c.b16 %v355, %v354
  %v370 = vpack.c.b16 %v357, %v356
  %v371 = vpack.c.b16 %v359, %v358
  %v372 = vpack.c.b16 %v361, %v360
  %v373 = vpack.c.b16 %v363, %v362
  %v374 = vpack.c.b16 %v365, %v364
  %v375 = vpack.c.b16 %v367, %v366
  %384 = vmatpush.bf16.msra.mxu0 %v375
  %385 = vmatpush.bf16.msra.mxu0 %v374
  %386 = vmatpush.bf16.msra.mxu0 %v373
  %387 = vmatpush.bf16.msra.mxu0 %v372
  %388 = vmatpush.bf16.msra.mxu0 %v371
  %389 = vmatpush.bf16.msra.mxu0 %v370
  %390 = vmatpush.bf16.msra.mxu0 %v369
  %391 = vmatpush.bf16.msra.mxu0 %v368
  %392 = vmatmul.bf16.gmra.mxu0 %v308
  %v393 = vpop.f32.mrf.mxu0
  %v394 = vadd.f32 %v334, %v393
  %v395 = vpop.f32.mrf.mxu0
  %v396 = vadd.f32 %v334, %v395
  %397 = vmatmul.bf16.gmra.mxu0 %v309
  %v398 = vpop.f32.mrf.mxu0
  %v399 = vadd.f32 %v334, %v398
  %v400 = vpop.f32.mrf.mxu0
  %v401 = vadd.f32 %v334, %v400
  %402 = vmatmul.bf16.gmra.mxu0 %v310
  %v403 = vpop.f32.mrf.mxu0
  %v404 = vadd.f32 %v334, %v403
  %v405 = vpop.f32.mrf.mxu0
  %v406 = vadd.f32 %v334, %v405
  %407 = vmatmul.bf16.gmra.mxu0 %v311
  %v408 = vpop.f32.mrf.mxu0
  %v409 = vadd.f32 %v334, %v408
  %v410 = vpop.f32.mrf.mxu0
  %v411 = vadd.f32 %v334, %v410
  %412 = vmatmul.bf16.gmra.mxu0 %v312
  %v413 = vpop.f32.mrf.mxu0
  %v414 = vadd.f32 %v334, %v413
  %v415 = vpop.f32.mrf.mxu0
  %v416 = vadd.f32 %v334, %v415
  %417 = vmatmul.bf16.gmra.mxu0 %v313
  %v418 = vpop.f32.mrf.mxu0
  %v419 = vadd.f32 %v334, %v418
  %v420 = vpop.f32.mrf.mxu0
  %v421 = vadd.f32 %v334, %v420
  %422 = vmatmul.bf16.gmra.mxu0 %v314
  %v423 = vpop.f32.mrf.mxu0
  %v424 = vadd.f32 %v334, %v423
  %v425 = vpop.f32.mrf.mxu0
  %v426 = vadd.f32 %v334, %v425
  %427 = vmatmul.bf16.gmra.mxu0 %v315
  %v428 = vpop.f32.mrf.mxu0
  %v429 = vadd.f32 %v334, %v428
  %v430 = vpop.f32.mrf.mxu0
  %v431 = vadd.f32 %v334, %v430
  %432 = vdwg.mxu0
  %v433 = vmax.f32 %v394, 0.0
  %v434 = vmax.f32 %v396, 0.0
  %v435 = vmax.f32 %v399, 0.0
  %v436 = vmax.f32 %v401, 0.0
  %v437 = vmax.f32 %v404, 0.0
  %v438 = vmax.f32 %v406, 0.0
  %v439 = vmax.f32 %v409, 0.0
  %v440 = vmax.f32 %v411, 0.0
  %v441 = vmax.f32 %v414, 0.0
  %v442 = vmax.f32 %v416, 0.0
  %v443 = vmax.f32 %v419, 0.0
  %v444 = vmax.f32 %v421, 0.0
  %v445 = vmax.f32 %v424, 0.0
  %v446 = vmax.f32 %v426, 0.0
  %v447 = vmax.f32 %v429, 0.0
  %v448 = vmax.f32 %v431, 0.0
  %v449 = vpack.c.bf16 %v434, %v433
  %v450 = vpack.c.bf16 %v436, %v435
  %v451 = vpack.c.bf16 %v438, %v437
  %v452 = vpack.c.bf16 %v440, %v439
  %v453 = vpack.c.bf16 %v442, %v441
  %v454 = vpack.c.bf16 %v444, %v443
  %v455 = vpack.c.bf16 %v446, %v445
  %v456 = vpack.c.bf16 %v448, %v447
  %v457 = vld [vmem:[%s7] sm:$0xf]
  %v458 = vld [vmem:[%s7 + $0x4] sm:$0xf]
  %v459 = vld [vmem:[%s7 + $0x8] sm:$0xf]
  %v460 = vld [vmem:[%s7 + $0xc] sm:$0xf]
  %v461 = vld [vmem:[%s7 + $0x10] sm:$0xf]
  %v462 = vld [vmem:[%s7 + $0x14] sm:$0xf]
  %v463 = vld [vmem:[%s7 + $0x18] sm:$0xf]
  %v464 = vld [vmem:[%s7 + $0x1c] sm:$0xf]
  %v465 = vld [vmem:[%s7 + $0x20] sm:$0xf]
  %v466 = vld [vmem:[%s7 + $0x24] sm:$0xf]
  %v467 = vld [vmem:[%s7 + $0x28] sm:$0xf]
  %v468 = vld [vmem:[%s7 + $0x2c] sm:$0xf]
  %v469 = vld [vmem:[%s7 + $0x30] sm:$0xf]
  %v470 = vld [vmem:[%s7 + $0x34] sm:$0xf]
  %v471 = vld [vmem:[%s7 + $0x38] sm:$0xf]
  %v472 = vld [vmem:[%s7 + $0x3c] sm:$0xf]
  %v473 = vld [vmem:[%s8] sm:$0x1]
  %v475 = vperm.slane %v473, 0
  %v493 = vunpack.c.l.b16 %v457
  %v494 = vunpack.c.l.b16 %v458
  %v495 = vunpack.c.l.b16 %v459
  %v496 = vunpack.c.l.b16 %v460
  %v497 = vunpack.c.l.b16 %v461
  %v498 = vunpack.c.l.b16 %v462
  %v499 = vunpack.c.l.b16 %v463
  %v500 = vunpack.c.l.b16 %v464
  %v501 = vunpack.c.l.b16 %v465
  %v502 = vunpack.c.l.b16 %v466
  %v503 = vunpack.c.l.b16 %v467
  %v504 = vunpack.c.l.b16 %v468
  %v505 = vunpack.c.l.b16 %v469
  %v506 = vunpack.c.l.b16 %v470
  %v507 = vunpack.c.l.b16 %v471
  %v508 = vunpack.c.l.b16 %v472
  %v509 = vpack.c.b16 %v494, %v493
  %v510 = vpack.c.b16 %v496, %v495
  %v511 = vpack.c.b16 %v498, %v497
  %v512 = vpack.c.b16 %v500, %v499
  %v513 = vpack.c.b16 %v502, %v501
  %v514 = vpack.c.b16 %v504, %v503
  %v515 = vpack.c.b16 %v506, %v505
  %v516 = vpack.c.b16 %v508, %v507
  %525 = vmatpush.bf16.msra.mxu0 %v516
  %526 = vmatpush.bf16.msra.mxu0 %v515
  %527 = vmatpush.bf16.msra.mxu0 %v514
  %528 = vmatpush.bf16.msra.mxu0 %v513
  %529 = vmatpush.bf16.msra.mxu0 %v512
  %530 = vmatpush.bf16.msra.mxu0 %v511
  %531 = vmatpush.bf16.msra.mxu0 %v510
  %532 = vmatpush.bf16.msra.mxu0 %v509
  %533 = vmatmul.bf16.gmra.mxu0 %v449
  %v534 = vpop.f32.mrf.mxu0
  %v535 = vadd.f32 %v475, %v534
  %v536 = vpop.f32.mrf.mxu0
  %v537 = vadd.f32 %v475, %v536
  %538 = vmatmul.bf16.gmra.mxu0 %v450
  %v539 = vpop.f32.mrf.mxu0
  %v540 = vadd.f32 %v475, %v539
  %v541 = vpop.f32.mrf.mxu0
  %v542 = vadd.f32 %v475, %v541
  %543 = vmatmul.bf16.gmra.mxu0 %v451
  %v544 = vpop.f32.mrf.mxu0
  %v545 = vadd.f32 %v475, %v544
  %v546 = vpop.f32.mrf.mxu0
  %v547 = vadd.f32 %v475, %v546
  %548 = vmatmul.bf16.gmra.mxu0 %v452
  %v549 = vpop.f32.mrf.mxu0
  %v550 = vadd.f32 %v475, %v549
  %v551 = vpop.f32.mrf.mxu0
  %v552 = vadd.f32 %v475, %v551
  %553 = vmatmul.bf16.gmra.mxu0 %v453
  %v554 = vpop.f32.mrf.mxu0
  %v555 = vadd.f32 %v475, %v554
  %v556 = vpop.f32.mrf.mxu0
  %v557 = vadd.f32 %v475, %v556
  %558 = vmatmul.bf16.gmra.mxu0 %v454
  %v559 = vpop.f32.mrf.mxu0
  %v560 = vadd.f32 %v475, %v559
  %v561 = vpop.f32.mrf.mxu0
  %v562 = vadd.f32 %v475, %v561
  %563 = vmatmul.bf16.gmra.mxu0 %v455
  %v564 = vpop.f32.mrf.mxu0
  %v565 = vadd.f32 %v475, %v564
  %v566 = vpop.f32.mrf.mxu0
  %v567 = vadd.f32 %v475, %v566
  %568 = vmatmul.bf16.gmra.mxu0 %v456
  %v569 = vpop.f32.mrf.mxu0
  %v570 = vadd.f32 %v475, %v569
  %v571 = vpop.f32.mrf.mxu0
  %v572 = vadd.f32 %v475, %v571
  %573 = vdwg.mxu0
  %v574 = vpack.c.bf16 %v535, %v535
  %v575 = vpack.c.bf16 %v537, %v537
  %v576 = vpack.c.bf16 %v540, %v540
  %v577 = vpack.c.bf16 %v542, %v542
  %v578 = vpack.c.bf16 %v545, %v545
  %v579 = vpack.c.bf16 %v547, %v547
  %v580 = vpack.c.bf16 %v550, %v550
  %v581 = vpack.c.bf16 %v552, %v552
  %v582 = vpack.c.bf16 %v555, %v555
  %v583 = vpack.c.bf16 %v557, %v557
  %v584 = vpack.c.bf16 %v560, %v560
  %v585 = vpack.c.bf16 %v562, %v562
  %v586 = vpack.c.bf16 %v565, %v565
  %v587 = vpack.c.bf16 %v567, %v567
  %v588 = vpack.c.bf16 %v570, %v570
  %v589 = vpack.c.bf16 %v572, %v572
  %590 = vst [vmem:[%s9] sm:$0xf] %v574
  %591 = vst [vmem:[%s9 + $0x4] sm:$0xf] %v575
  %592 = vst [vmem:[%s9 + $0x8] sm:$0xf] %v576
  %593 = vst [vmem:[%s9 + $0xc] sm:$0xf] %v577
  %594 = vst [vmem:[%s9 + $0x10] sm:$0xf] %v578
  %595 = vst [vmem:[%s9 + $0x14] sm:$0xf] %v579
  %596 = vst [vmem:[%s9 + $0x18] sm:$0xf] %v580
  %597 = vst [vmem:[%s9 + $0x1c] sm:$0xf] %v581
  %598 = vst [vmem:[%s9 + $0x20] sm:$0xf] %v582
  %599 = vst [vmem:[%s9 + $0x24] sm:$0xf] %v583
  %600 = vst [vmem:[%s9 + $0x28] sm:$0xf] %v584
  %601 = vst [vmem:[%s9 + $0x2c] sm:$0xf] %v585
  %602 = vst [vmem:[%s9 + $0x30] sm:$0xf] %v586
  %603 = vst [vmem:[%s9 + $0x34] sm:$0xf] %v587
  %604 = vst [vmem:[%s9 + $0x38] sm:$0xf] %v588
  %605 = vst [vmem:[%s9 + $0x3c] sm:$0xf] %v589
  // Predicated region
  $region38: #{mlp_forward.1} parent=0 // pred_check
    _
  $region39: #{mlp_forward.1} parent=0 // pred_check_branch
    %607 = sbr.rel (0) target = $region41
  $region40: #{mlp_forward.1} parent=0 // pred_region
    _
  $region41: #{mlp_forward.1} parent=0 // pred_fallthru
    _
  // Predicated region
  $region42: #{mlp_forward.1} parent=0 // pred_check
    _
  $region43: #{mlp_forward.1} parent=0 // pred_check_branch
    %609 = sbr.rel (0) target = $region45
  $region44: #{mlp_forward.1} parent=0 // pred_region
    _
  $region45: #{mlp_forward.1} parent=0 // pred_fallthru
    _

</llo_original>
